<compile_context>
chip_gen: v6e
topology: v6e:2x2x1
jax: 0.10.0
libtpu: 0.0.40
codegen_flags: <defaults>
</compile_context>

<pallas_src>
import functools

import jax
import jax.numpy as jnp
import numpy as np
from jax import lax
from jax.experimental import pallas as pl
from jax.experimental.pallas import tpu as pltpu


# ---------------------------------------------------------------------------
# Hardware / tiling helpers
# ---------------------------------------------------------------------------

def _vmem_capacity_bytes():
    """Physical VMEM per TensorCore; conservative 64 MiB (v7x-safe) fallback."""
    try:
        info = pltpu.get_tpu_info()
        cap = int(getattr(info, "vmem_capacity_bytes", 0) or 0)
        if cap > 0:
            return cap
    except Exception:
        pass
    return 64 * 1024 * 1024


def _largest_divisor_leq(n, bound):
    for d in range(max(1, min(n, bound)), 0, -1):
        if n % d == 0:
            return d
    return 1


def _pick_tiles(B, C, L, itemsize, budget_bytes):
    """Pick (b_tile, c_tile, l_tile) for a (B, C, L) array.

    Constraints: l_tile % 128 == 0 or l_tile == L; c_tile % sublane == 0 or
    c_tile == C (sublane is dtype-aware: 8/16/32 for 4/2/1-byte dtypes).
    b_tile always divides B (no ragged batch rows -> no OOB SMEM reads).
    """
    sub = {4: 8, 2: 16, 1: 32}.get(itemsize, 8)

    # Lane (last-dim) tile: full L when affordable at the minimum channel tile,
    # else a multiple of 128 (prefer one dividing L to avoid a ragged block).
    rows_min = C if C <= sub else sub
    lane_budget = max(128, budget_bytes // max(1, rows_min * itemsize))
    if L <= lane_budget or L <= 128:
        l_tile = L
    else:
        l_tile = (lane_budget // 128) * 128
        t = l_tile
        while t > 128 and (L % t):
            t -= 128
        if L % t == 0:
            l_tile = t

    # Channel tile: full C when affordable, else a multiple of `sub`.
    max_rows = max(1, budget_bytes // max(1, l_tile * itemsize))
    if C <= max_rows or C <= sub:
        c_tile = C
    else:
        c_tile = max(sub, (max_rows // sub) * sub)
        t = c_tile
        while t > sub and (C % t):
            t -= sub
        if C % t == 0:
            c_tile = t

    # Batch packing when a whole (C, L) plane is far below budget.
    b_tile = 1
    if c_tile == C and l_tile == L:
        plane = max(1, C * L * itemsize)
        b_tile = _largest_divisor_leq(B, max(1, budget_bytes // plane))
    return b_tile, c_tile, l_tile


def _ensure_min_steps(B, C, L, b_tile, c_tile, l_tile, min_steps):
    """Make sure v7x megacore has >= min_steps grid steps to shard."""
    steps = (B // b_tile) * pl.cdiv(C, c_tile) * pl.cdiv(L, l_tile)
    if steps >= min_steps:
        return b_tile, c_tile, l_tile
    if b_tile > 1:
        b_tile = _largest_divisor_leq(B, max(1, b_tile // 2))
    elif l_tile >= 256 and l_tile % 256 == 0:
        l_tile //= 2
    return b_tile, c_tile, l_tile


# ---------------------------------------------------------------------------
# Streaming path (full-plane read + masked write, lane-dense flattened layout)
# ---------------------------------------------------------------------------

def _drop_stripes_stream_kernel(bgn_ref, dist_ref, x_ref, o_ref, *,
                                dim, stripes_num, freq_bins, b_tile, l_tile):
    """bgn_ref/dist_ref: flat (B*stripes_num,) int32 in SMEM (scalar prefetch).
    x_ref/o_ref: VMEM blocks of shape (b_tile, c_tile, l_tile), L = T*F."""
    bi = pl.program_id(0)
    l0 = pl.program_id(2) * l_tile

    # Absolute position along the flattened (T*F) axis; hoisted out of the
    # per-row loop (it does not depend on the batch row).
    lane = lax.broadcasted_iota(jnp.int32, (1, l_tile), 1) + l0
    if dim == 2:
        pos, scale = lane, freq_bins            # time stripes: contiguous lanes
    else:
        scale = 1
        if freq_bins & (freq_bins - 1) == 0:
            pos = lane & (freq_bins - 1)        # lane % F for power-of-two F
        else:
            # TODO(synk): non-power-of-two freq_bins relies on vector i32 rem.
            pos = lax.rem(lane, jnp.int32(freq_bins))

    for i in range(b_tile):                     # static unroll: packed batch rows
        base = (bi * b_tile + i) * stripes_num
        drop = None
        for s in range(stripes_num):            # static unroll: few stripes
            bgn = bgn_ref[base + s] * scale
            dist = dist_ref[base + s] * scale
            # Fused range test: bgn <= pos < bgn+dist  <=>  (pos - bgn) u< dist.
            hit = (pos - bgn).astype(jnp.uint32) < dist.astype(jnp.uint32)
            drop = hit if drop is None else jnp.logical_or(drop, hit)
        xi = x_ref[i]
        if drop is None:                        # stripes_num == 0
            o_ref[i] = xi
        else:
            o_ref[i] = jnp.where(drop, jnp.array(0, dtype=xi.dtype), xi)


def drop_stripes_pallas(x, bgn, dist, *, dim, stripes_num,
                        block_budget_bytes=None, min_grid_steps=2):
    """x: (B, C, T, F); bgn/dist: (B, stripes_num) int32 stripe params."""
    assert x.ndim == 4 and dim in (2, 3)
    if stripes_num == 0:
        return x
    B, C, T, F = x.shape
    L = T * F
    itemsize = jnp.dtype(x.dtype).itemsize

    vmem_cap = _vmem_capacity_bytes()
    if block_budget_bytes is None:
        # ~2 MiB blocks on 64 MiB-VMEM chips (v7x), ~6 MiB with 128 MiB (v5e/v6e).
        block_budget_bytes = (6 << 20) if vmem_cap >= (100 << 20) else (2 << 20)

    x3 = x.reshape(B, C, L)                     # lane-dense layout for full vst
    bgn1 = jnp.asarray(bgn, jnp.int32).reshape(B * stripes_num)
    dist1 = jnp.asarray(dist, jnp.int32).reshape(B * stripes_num)

    b_tile, c_tile, l_tile = _pick_tiles(B, C, L, itemsize, block_budget_bytes)
    b_tile, c_tile, l_tile = _ensure_min_steps(B, C, L, b_tile, c_tile, l_tile,
                                               min_grid_steps)
    grid = (B // b_tile, pl.cdiv(C, c_tile), pl.cdiv(L, l_tile))

    block_bytes = b_tile * c_tile * l_tile * itemsize
    vmem_limit = int(min(max(32 << 20, 4 * block_bytes + (4 << 20)),
                         max(24 << 20, vmem_cap - (4 << 20))))

    kernel = functools.partial(_drop_stripes_stream_kernel, dim=dim,
                               stripes_num=stripes_num, freq_bins=F,
                               b_tile=b_tile, l_tile=l_tile)
    out = pl.pallas_call(
        kernel,
        out_shape=jax.ShapeDtypeStruct((B, C, L), x.dtype),
        grid_spec=pltpu.PrefetchScalarGridSpec(
            num_scalar_prefetch=2,              # flat bgn/dist land in SMEM
            grid=grid,
            in_specs=[pl.BlockSpec((b_tile, c_tile, l_tile),
                                   lambda b, c, l, *_: (b, c, l))],
            out_specs=pl.BlockSpec((b_tile, c_tile, l_tile),
                                   lambda b, c, l, *_: (b, c, l)),
        ),
        compiler_params=pltpu.CompilerParams(
            dimension_semantics=("parallel", "parallel", "parallel"),
            vmem_limit_bytes=vmem_limit),
    )(bgn1, dist1, x3)
    return out.reshape(B, C, T, F)


# ---------------------------------------------------------------------------
# Sparse in-place path (aliased output; only stripe windows touch HBM)
# ---------------------------------------------------------------------------

def _drop_stripes_sparse_kernel(bgn_ref, dist_ref, x_ref, o_ref, buf, sem, *,
                                dim, stripes_num, window, total_width):
    """o_ref aliases x (HBM, pl.ANY).  For every stripe of this batch element,
    read a static-size window, zero the [bgn, bgn+dist) part, write it back.
    Windows of one batch element may overlap -> serialized start/wait."""
    del x_ref                                   # same buffer as o_ref (aliased)
    b = pl.program_id(0)
    for s in range(stripes_num):                # static unroll
        bgn = bgn_ref[b * stripes_num + s]
        dist = dist_ref[b * stripes_num + s]
        start = jnp.minimum(jnp.maximum(bgn, 0), total_width - window)

        @pl.when(dist > 0)
        def _zero_stripe(bgn=bgn, dist=dist, start=start):
            if dim == 2:
                win = o_ref.at[pl.ds(b, 1), :, pl.ds(start, window), :]
                axis = 2
            else:
                win = o_ref.at[pl.ds(b, 1), :, :, pl.ds(start, window)]
                axis = 3
            cp_in = pltpu.make_async_copy(win, buf, sem)
            cp_in.start()
            cp_in.wait()
            pos = lax.broadcasted_iota(jnp.int32, buf.shape, axis) + start
            drop = (pos - bgn).astype(jnp.uint32) < dist.astype(jnp.uint32)
            buf[...] = jnp.where(drop, jnp.array(0, dtype=buf.dtype), buf[...])
            cp_out = pltpu.make_async_copy(buf, win, sem)
            cp_out.start()
            cp_out.wait()


def drop_stripes_pallas_sparse(x, bgn, dist, *, dim, stripes_num, max_width):
    """In-place-style variant.  Preconditions (guaranteed by the sampler):
    0 <= dist <= max_width and bgn + dist <= total_width."""
    assert x.ndim == 4 and dim in (2, 3)
    if stripes_num == 0:
        return x
    B, C, T, F = x.shape
    total_width = x.shape[dim]
    window = int(max(1, min(max_width, total_width)))

    bgn1 = jnp.asarray(bgn, jnp.int32).reshape(B * stripes_num)
    dist1 = jnp.asarray(dist, jnp.int32).reshape(B * stripes_num)
    buf_shape = (1, C, window, F) if dim == 2 else (1, C, T, window)

    kernel = functools.partial(_drop_stripes_sparse_kernel, dim=dim,
                               stripes_num=stripes_num, window=window,
                               total_width=total_width)
    return pl.pallas_call(
        kernel,
        out_shape=jax.ShapeDtypeStruct(x.shape, x.dtype),
        grid=(B,),
        in_specs=[
            pl.BlockSpec(memory_space=pltpu.MemorySpace.SMEM),   # bgn (flat)
            pl.BlockSpec(memory_space=pltpu.MemorySpace.SMEM),   # dist (flat)
            pl.BlockSpec(memory_space=pl.ANY),                   # x stays in HBM
        ],
        out_specs=pl.BlockSpec(memory_space=pl.ANY),
        scratch_shapes=[pltpu.VMEM(buf_shape, x.dtype),
                        pltpu.SemaphoreType.DMA],
        input_output_aliases={2: 0},            # x aliases the output buffer
        compiler_params=pltpu.CompilerParams(
            dimension_semantics=("parallel",),
            has_side_effects=True),
    )(bgn1, dist1, x)


# ---------------------------------------------------------------------------
# Module wrapper
# ---------------------------------------------------------------------------

class DropStripes:
    """JAX/Pallas port of the PyTorch DropStripes module."""

    def __init__(self, dim, drop_width, stripes_num):
        assert dim in [2, 3]
        self.dim = dim
        self.drop_width = drop_width
        self.stripes_num = stripes_num

    def _sparse_wins(self, x):
        B, C, T, F = x.shape
        itemsize = jnp.dtype(x.dtype).itemsize
        plane = C * T * F * itemsize
        w = min(self.drop_width, x.shape[self.dim])
        window = C * (w * F if self.dim == 2 else T * w) * itemsize
        # Streaming moves 2*plane bytes per batch row; the serialized sparse RMW
        # costs ~2 DMA round trips + 2*window bytes per stripe.  Require a clear
        # margin (latency modeled as a few MB-equivalents of HBM time).
        return 2 * plane > self.stripes_num * (4 * window + (8 << 20))

    def __call__(self, x, key, training=True, mode="auto"):
        assert x.ndim == 4  # (batch, channels, time_steps, freq_bins)
        if (not training) or self.stripes_num == 0 or self.drop_width <= 0:
            return x
        batch_size = x.shape[0]
        total_width = x.shape[self.dim]

        k_dist, k_bgn = jax.random.split(key)
        # distance ~ randint(0, drop_width)   (torch.randint high-exclusive)
        dist = jax.random.randint(
            k_dist, (batch_size, self.stripes_num), 0, self.drop_width,
            dtype=jnp.int32)
        # bgn ~ randint(0, total_width - distance); variable upper bound handled
        # with a modulo (tiny modulo bias, not bit-identical to torch -- fine
        # for augmentation).
        raw = jax.random.randint(
            k_bgn, (batch_size, self.stripes_num), 0, jnp.iinfo(jnp.int32).max,
            dtype=jnp.int32)
        bgn = raw % jnp.maximum(total_width - dist, 1)

        if mode == "auto":
            mode = "sparse" if self._sparse_wins(x) else "stream"
        if mode == "sparse":
            return drop_stripes_pallas_sparse(
                x, bgn, dist, dim=self.dim, stripes_num=self.stripes_num,
                max_width=self.drop_width)
        return drop_stripes_pallas(
            x, bgn, dist, dim=self.dim, stripes_num=self.stripes_num)


# ---------------------------------------------------------------------------
# Tests
# ---------------------------------------------------------------------------

if __name__ == "__main__":
    key = jax.random.PRNGKey(0)
    k_x, k_t, k_f = jax.random.split(key, 3)

    B, C, T, F = 2, 4, 16, 16
    x = jax.random.normal(k_x, (B, C, T, F), dtype=jnp.float32)

    bgn = jnp.array([[1, 5], [0, 9]], dtype=jnp.int32)
    dist = jnp.array([[3, 2], [0, 4]], dtype=jnp.int32)

    def ref_drop(x, bgn, dist, dim):
        ref = np.asarray(x).copy()
        for b in range(bgn.shape[0]):
            for s in range(bgn.shape[1]):
                b0, d0 = int(bgn[b, s]), int(dist[b, s])
                if dim == 2:
                    ref[b, :, b0:b0 + d0, :] = 0
                else:
                    ref[b, :, :, b0:b0 + d0] = 0
        return ref

    for dim in (2, 3):
        want = ref_drop(x, bgn, dist, dim)
        # Streaming path, default tiling (>= 2 grid steps for megacore).
        y = jax.block_until_ready(
            drop_stripes_pallas(x, bgn, dist, dim=dim, stripes_num=2))
        np.testing.assert_array_equal(np.asarray(y), want)
        # Streaming path with batch packing (2 batch rows per block).
        y2 = jax.block_until_ready(
            drop_stripes_pallas(x, bgn, dist, dim=dim, stripes_num=2,
                                min_grid_steps=1))
        np.testing.assert_array_equal(np.asarray(y2), want)
        # Sparse in-place (aliased) path.
        y3 = jax.block_until_ready(
            drop_stripes_pallas_sparse(x, bgn, dist, dim=dim, stripes_num=2,
                                       max_width=5))
        np.testing.assert_array_equal(np.asarray(y3), want)

    # End-to-end module usage: random stripes (train) + identity (eval).
    mod_t = DropStripes(dim=2, drop_width=4, stripes_num=2)
    mod_f = DropStripes(dim=3, drop_width=4, stripes_num=2)
    y_t = jax.block_until_ready(mod_t(x, k_t, training=True))
    y_f = jax.block_until_ready(mod_f(x, k_f, training=True))
    assert y_t.shape == x.shape and y_t.dtype == x.dtype
    assert y_f.shape == x.shape and y_f.dtype == x.dtype
    assert (mod_t(x, k_t, training=False) == x).all()

    print("KERNEL_OK")
</pallas_src>

<mosaic_0001>
module attributes {stable_mosaic.version = 11 : i64} {
  func.func @_drop_stripes_stream_kernel(%arg0: i32, %arg1: i32, %arg2: i32, %arg3: memref<4xi32, #tpu.memory_space<smem>>, %arg4: memref<4xi32, #tpu.memory_space<smem>>, %arg5: memref<1x4x256xf32, #tpu.memory_space<vmem>>, %arg6: memref<1x4x256xf32, #tpu.memory_space<vmem>>) attributes {dimension_semantics = [#tpu.dimension_semantics<parallel>, #tpu.dimension_semantics<parallel>, #tpu.dimension_semantics<parallel>], iteration_bounds = array<i64: 2, 1, 1>, scalar_prefetch = 2 : i64, scratch_operands = 0 : i64, tpu.core_type = #tpu.core_type<tc>, window_params = [{transform_indices = @transform_0, window_bounds = array<i64: 1, 4, 256>}, {transform_indices = @transform_1, window_bounds = array<i64: 1, 4, 256>}]} {
    %c256_i32 = arith.constant 256 : i32
    %0 = arith.muli %arg2, %c256_i32 : i32
    %1 = tpu.iota {dimensions = array<i32: 1>} : vector<1x256xi32>
    %2 = vector.broadcast %0 : i32 to vector<1x256xi32>
    %3 = arith.addi %1, %2 : vector<1x256xi32>
    %c1_i32 = arith.constant 1 : i32
    %4 = arith.muli %arg0, %c1_i32 : i32
    %c0_i32 = arith.constant 0 : i32
    %5 = arith.addi %4, %c0_i32 : i32
    %c2_i32 = arith.constant 2 : i32
    %6 = arith.muli %5, %c2_i32 : i32
    %c0_i32_0 = arith.constant 0 : i32
    %7 = arith.addi %6, %c0_i32_0 : i32
    %8 = arith.index_cast %7 : i32 to index
    %9 = memref.load %arg3[%8] : memref<4xi32, #tpu.memory_space<smem>>
    %c16_i32 = arith.constant 16 : i32
    %10 = arith.muli %9, %c16_i32 : i32
    %c0_i32_1 = arith.constant 0 : i32
    %11 = arith.addi %6, %c0_i32_1 : i32
    %12 = arith.index_cast %11 : i32 to index
    %13 = memref.load %arg4[%12] : memref<4xi32, #tpu.memory_space<smem>>
    %c16_i32_2 = arith.constant 16 : i32
    %14 = arith.muli %13, %c16_i32_2 : i32
    %15 = vector.broadcast %10 : i32 to vector<1x256xi32>
    %16 = arith.subi %3, %15 : vector<1x256xi32>
    %17 = vector.broadcast %14 : i32 to vector<1x256xi32>
    %18 = arith.cmpi ult, %16, %17 : vector<1x256xi32>
    %c1_i32_3 = arith.constant 1 : i32
    %19 = arith.addi %6, %c1_i32_3 : i32
    %20 = arith.index_cast %19 : i32 to index
    %21 = memref.load %arg3[%20] : memref<4xi32, #tpu.memory_space<smem>>
    %c16_i32_4 = arith.constant 16 : i32
    %22 = arith.muli %21, %c16_i32_4 : i32
    %c1_i32_5 = arith.constant 1 : i32
    %23 = arith.addi %6, %c1_i32_5 : i32
    %24 = arith.index_cast %23 : i32 to index
    %25 = memref.load %arg4[%24] : memref<4xi32, #tpu.memory_space<smem>>
    %c16_i32_6 = arith.constant 16 : i32
    %26 = arith.muli %25, %c16_i32_6 : i32
    %27 = vector.broadcast %22 : i32 to vector<1x256xi32>
    %28 = arith.subi %3, %27 : vector<1x256xi32>
    %29 = vector.broadcast %26 : i32 to vector<1x256xi32>
    %30 = arith.cmpi ult, %28, %29 : vector<1x256xi32>
    %31 = arith.ori %18, %30 : vector<1x256xi1>
    %c0 = arith.constant 0 : index
    %c0_7 = arith.constant 0 : index
    %c0_8 = arith.constant 0 : index
    %32 = vector.load %arg5[%c0, %c0_7, %c0_8] : memref<1x4x256xf32, #tpu.memory_space<vmem>>, vector<1x4x256xf32>
    %33 = vector.shape_cast %32 : vector<1x4x256xf32> to vector<4x256xf32>
    %cst = arith.constant 0.000000e+00 : f32
    %34 = vector.shape_cast %31 : vector<1x256xi1> to vector<1x256xi1>
    %35 = vector.broadcast %34 : vector<1x256xi1> to vector<4x256xi1>
    %36 = vector.broadcast %cst : f32 to vector<4x256xf32>
    %37 = arith.select %35, %36, %33 : vector<4x256xi1>, vector<4x256xf32>
    %c0_9 = arith.constant 0 : index
    %c0_10 = arith.constant 0 : index
    %c0_11 = arith.constant 0 : index
    %38 = vector.load %arg6[%c0_9, %c0_10, %c0_11] : memref<1x4x256xf32, #tpu.memory_space<vmem>>, vector<1x4x256xf32>
    %39 = vector.shape_cast %38 : vector<1x4x256xf32> to vector<4x256xf32>
    %40 = vector.shape_cast %37 : vector<4x256xf32> to vector<1x4x256xf32>
    tpu.vector_store %arg6[%c0_9, %c0_10, %c0_11], %40 {strides = array<i32>} : memref<1x4x256xf32, #tpu.memory_space<vmem>>, vector<1x4x256xf32>,
    return
  }
  func.func @transform_0(%arg0: i32, %arg1: i32, %arg2: i32, %arg3: memref<4xi32, #tpu.memory_space<smem>>, %arg4: memref<4xi32, #tpu.memory_space<smem>>) -> (i32, i32, i32) {
    %c0_i32 = arith.constant 0 : i32
    return %arg0, %arg1, %arg2 : i32, i32, i32
  }
  func.func @transform_1(%arg0: i32, %arg1: i32, %arg2: i32, %arg3: memref<4xi32, #tpu.memory_space<smem>>, %arg4: memref<4xi32, #tpu.memory_space<smem>>) -> (i32, i32, i32) {
    %c0_i32 = arith.constant 0 : i32
    return %arg0, %arg1, %arg2 : i32, i32, i32
  }
}

</mosaic_0001>

<llo_original>
// kernel: tpu_custom_call.1
$region0: #{tpu_custom_call.1}
  #allocation0 [shape = 'u32[]', space=smem, size = 0x4, offset = 0x4, fixed_abs, tag = 'smem constant byte address 0x4 - core index']
  #allocation1 [shape = 'u32[144,128]{1,0:T(1,128)}', space=vmem, size = 0x12000, scoped, tag = 'internal scratch']
  #allocation2 [shape = 's32[1]{0}', space=sflag, size = 0x4, scoped, tag = 'scoped memory for tpu_custom_call.1']
  #allocation3 [shape = 'u8[512]{0}', space=smem, size = 0x200, scoped, tag = 'prefetched SMEM operand 0']
  #allocation4 [shape = 'u8[512]{0}', space=smem, size = 0x200, scoped, tag = 'prefetched SMEM operand 1']
  %s0 = inlined_call_operand.hbm [shape: s32[4], index: 0, kind: input, shape index: {}]
  %s1 = inlined_call_operand.vmem [shape: s32[4], index: 1, kind: input, shape index: {}]
  %s2 = inlined_call_operand.hbm [shape: f32[2,4,256], index: 2, kind: input, shape index: {}]
  %s3 = inlined_call_operand.hbm [shape: f32[2,4,256], index: 3, kind: output, shape index: {}]
  %s4 = sld [smem:[#allocation0]]
  $region41: #{tpu_custom_call.1} parent=0
    _
  %s6 = ssub.s32 1, %s4
  %s7 = scalar_select 0, %s6, %s4
  %9 = dma.hbm_to_smem %s0, 16, [#allocation3], [#allocation2]
  %s10 = sshll.u32 %s1, 4
  %s11 = int_to_ptr.vmem [resolvable:$true] %s10
  %13 = dma.vmem_to_smem %s11, 16, [#allocation4], [#allocation2]
  %14 = dma.done [#allocation2], 32
  %15 = sfence
  $region1: #{tpu_custom_call.1} parent=0
    #allocation5 [shape = 'u8[8192]{0}', space=vmem, size = 0x2000, scoped, tag = 'input window, operand 2']
    #allocation6 [shape = 's32[2]{0}', space=sflag, size = 0x8, scoped, tag = 'scoped memory for tpu_custom_call.1']
    #allocation7 [shape = 's32[2]{0}', space=sflag, size = 0x8, scoped, tag = 'scoped memory for tpu_custom_call.1']
    #allocation8 [shape = 'u8[8192]{0}', space=vmem, size = 0x2000, scoped, tag = 'output window, operand 0']
    %16 = vsyncpa [#allocation6], 0
    %s17 = scalar_lea.sflag [#allocation6], 1
    %18 = vsyncpa %s17, 0
    %19 = vsyncpa [#allocation7], 0
    %s20 = scalar_lea.sflag [#allocation7], 1
    %21 = vsyncpa %s20, 0
    loop: start=0, step=1, limit=4
    $region2: #{tpu_custom_call.1} parent=1 // loop_pre_header
      _
    $region3: #{tpu_custom_call.1} parent=1 // loop_header
      %s23 = sphi 0, %s27
      %p24 = scmp.ge.s32.totalorder %s23, 4
      %s30 = sphi 0, %s49
      %s31 = sphi 0, %s45
      %s32 = sphi 0, %s41
      %s33 = sphi 0, %s30
      %s34 = sphi 0, %s31
      %s35 = sphi 0, %s32
      %s36 = sphi 0, %s33
      %s37 = sphi 0, %s34
      %s38 = sphi 0, %s35
      %s56 = sphi 0, %s58
      %s59 = sphi 0, %s56
      %s60 = sphi 0, %s59
      %s76 = sphi 0, %s60
      %s86 = sphi 0, %s88
      %s89 = sphi 0, %s86
      %s90 = sphi 0, %s89
      %s106 = sphi 0, %s90
    $region4: #{tpu_custom_call.1} parent=1 // loop_header_branch
      %26 = sbr.rel (%p24) target = $region8
    $region5: #{tpu_custom_call.1} parent=1 // loop_body
      %s28 = ssub.s32 %s23, 1
      %s29 = ssub.s32 %s23, 2
      %s39 = sadd.s32 1, %s32
      %p40 = scmp.ge.s32.totalorder %s39, 1
      %s41 = scalar_select %p40, 0, %s39
      %s42 = sadd.s32 1, %s31
      %s43 = scalar_select %p40, %s42, %s31
      %p44 = scmp.ge.s32.totalorder %s43, 1
      %s45 = scalar_select %p44, 0, %s43
      %s46 = sadd.s32 1, %s30
      %s47 = scalar_select %p44, %s46, %s30
      %p48 = scmp.ge.s32.totalorder %s47, 2
      %s49 = scalar_select %p48, 0, %s47
      %s50 = ssub.s32 %s30, %s49
      %s51 = ssub.s32 %s31, %s45
      %s52 = sor.u32 %s50, %s51
      %s53 = ssub.s32 %s32, %s41
      %s54 = sor.u32 %s52, %s53
      %p55 = scmp.eq.s32.totalorder %s54, 0
      %s57 = sadd.s32 %s56, 1
      %s58 = scalar_select %p55, %s56, %s57
      %p61 = pneg %p55
      %p62 = scmp.eq.s32.totalorder %s23, 1
      %p63 = por %p61, %p62
      %p64 = scmp.ne.s32.totalorder %s56, %s59
      %p65 = scmp.eq.s32.totalorder %s23, 0
      %p66 = por %p64, %p65
      %p67 = scmp.ne.s32.totalorder %s56, %s59
      %p68 = scmp.eq.s32.totalorder %s28, 1
      %p69 = por %p67, %p68
      %p70 = scmp.ne.s32.totalorder %s59, %s60
      %p71 = scmp.eq.s32.totalorder %s28, 0
      %p72 = por %p70, %p71
      %p73 = scmp.ne.s32.totalorder %s59, %s60
      %p74 = scmp.eq.s32.totalorder %s29, 1
      %p75 = por %p73, %p74
      %p77 = scmp.ne.s32.totalorder %s60, %s76
      %p78 = scmp.eq.s32.totalorder %s29, 0
      %p79 = por %p77, %p78
      %s80 = ssub.s32 %s30, %s49
      %s81 = ssub.s32 %s31, %s45
      %s82 = sor.u32 %s80, %s81
      %s83 = ssub.s32 %s32, %s41
      %s84 = sor.u32 %s82, %s83
      %p85 = scmp.eq.s32.totalorder %s84, 0
      %s87 = sadd.s32 %s86, 1
      %s88 = scalar_select %p85, %s86, %s87
      %p91 = pneg %p85
      %p92 = scmp.eq.s32.totalorder %s23, 1
      %p93 = por %p91, %p92
      %p94 = scmp.ne.s32.totalorder %s86, %s89
      %p95 = scmp.eq.s32.totalorder %s23, 0
      %p96 = por %p94, %p95
      %p97 = scmp.ne.s32.totalorder %s86, %s89
      %p98 = scmp.eq.s32.totalorder %s28, 1
      %p99 = por %p97, %p98
      %p100 = scmp.ne.s32.totalorder %s89, %s90
      %p101 = scmp.eq.s32.totalorder %s28, 0
      %p102 = por %p100, %p101
      %p103 = scmp.ne.s32.totalorder %s89, %s90
      %p104 = scmp.eq.s32.totalorder %s29, 1
      %p105 = por %p103, %p104
      %p107 = scmp.ne.s32.totalorder %s90, %s106
      %p108 = scmp.eq.s32.totalorder %s29, 0
      %p109 = por %p107, %p108
      %p110 = scmp.le.s32.totalorder 1, %s23
      %p111 = scmp.lt.s32.totalorder %s23, 3
      %p112 = pnand %p110, %p111
      %p113 = pneg %p112
      // Predicated region
      $region9: #{tpu_custom_call.1} parent=5 // pred_check
        _
      $region10: #{tpu_custom_call.1} parent=5 // pred_check_branch
        %115 = sbr.rel (%p112) target = $region12
      $region11: #{tpu_custom_call.1} parent=5 // pred_region
        %s116 = ssub.s32 %s23, 1
      $region12: #{tpu_custom_call.1} parent=5 // pred_fallthru
        _
      %p117 = scmp.lt.s32.totalorder %s23, 2
      // Predicated region
      $region13: #{tpu_custom_call.1} parent=5 // pred_check
        %p118 = pneg %p117
      $region14: #{tpu_custom_call.1} parent=5 // pred_check_branch
        %120 = sbr.rel (%p118) target = $region16
      $region15: #{tpu_custom_call.1} parent=5 // pred_region
        // Predicated region
        $region17: #{tpu_custom_call.1} parent=15 // pred_check
          %p121 = pneg %p66
        $region18: #{tpu_custom_call.1} parent=15 // pred_check_branch
          %123 = sbr.rel (%p121) target = $region20
        $region19: #{tpu_custom_call.1} parent=15 // pred_region
          %s124 = sand.u32 %s56, 1
          %s125 = scalar_lea.sflag [#allocation6], %s124
          %s126 = sand.u32 %s56, 1
          %s127 = smul.addr %s126, 8
          %s128 = scalar_lea.vmem [#allocation5], %s127
          %s129 = smul.u32 2, %s32
          %s131 = ssub.s32 128, 128
          %132 = vsyncadd %s125, %s131
          %s133 = smul.addr %s31, 2
          %s134 = sadd.s32 %s129, %s133
          %s135 = smul.addr %s30, 2
          %s136 = sadd.s32 %s134, %s135
          %s137 = smul.addr %s136, 64
          %s138 = scalar_lea.hbm %s2, %s137
          %s140 = sshll.u32 %s128, 4
          %s141 = int_to_ptr.vmem [resolvable:$true] %s140
          %143 = dma.hbm_to_vmem [thread:$0]  %s138, 128, %s141, %s125
        $region20: #{tpu_custom_call.1} parent=15 // pred_fallthru
          _
      $region16: #{tpu_custom_call.1} parent=5 // pred_fallthru
        _
      %p144 = scmp.le.s32.totalorder 1, %s23
      %p145 = scmp.lt.s32.totalorder %s23, 3
      %p146 = pnand %p144, %p145
      %p147 = pneg %p146
      // Predicated region
      $region21: #{tpu_custom_call.1} parent=5 // pred_check
        _
      $region22: #{tpu_custom_call.1} parent=5 // pred_check_branch
        %149 = sbr.rel (%p146) target = $region24
      $region23: #{tpu_custom_call.1} parent=5 // pred_region
        %s150 = ssub.s32 %s23, 1
        %s151 = sand.u32 %s59, 1
        %s152 = scalar_lea.sflag [#allocation6], %s151
        %s153 = sand.u32 %s59, 1
        %s154 = smul.addr %s153, 8
        %s155 = scalar_lea.vmem [#allocation5], %s154
        // Predicated region
        $region25: #{tpu_custom_call.1} parent=23 // pred_check
          %p156 = pneg %p72
        $region26: #{tpu_custom_call.1} parent=23 // pred_check_branch
          %158 = sbr.rel (%p156) target = $region28
        $region27: #{tpu_custom_call.1} parent=23 // pred_region
          %159 = dma.done %s152, 128
        $region28: #{tpu_custom_call.1} parent=23 // pred_fallthru
          _
        %s160 = sand.u32 %s59, 1
        %s161 = scalar_lea.sflag [#allocation6], %s160
        %s162 = sand.u32 %s59, 1
        %s163 = smul.addr %s162, 8
        %s164 = scalar_lea.vmem [#allocation5], %s163
        %p165 = pneg %p72
        %p166 = pneg %p69
        %p167 = pneg %p102
        %p168 = pneg %p99
        %s169 = sand.u32 %s89, 1
        %s170 = scalar_lea.sflag [#allocation7], %s169
        %s171 = sand.u32 %s89, 1
        %s172 = smul.addr %s171, 8
        %s173 = scalar_lea.vmem [#allocation8], %s172
        %s174 = smul.u32 2, %s35
        %s175 = smul.u32 2, %s35
        %s176 = smul.u32 %s35, 256
        %v177 = vlaneseq
        %v178 = vand.u32 %v177, 127
        %v179 = vadd.s32 %v178, 128
        %v180 = vstv %s176
        %v181 = vadd.s32 %v178, %v180
        %v182 = vadd.s32 %v179, %v180
        %s183 = smul.u32 %s33, 2
        %s184 = sld [smem:[#allocation3 + %s183]]
        %s185 = smul.u32 %s184, 16
        %s186 = sld [smem:[#allocation4 + %s183]]
        %s187 = smul.u32 %s186, 16
        %v188 = vstv %s185
        %v189 = vsub.s32 %v181, %v188
        %v190 = vsub.s32 %v182, %v188
        %v191 = vstv %s187
        %vm192 = vcmp.lt.u32.totalorder %v189, %v191
        %vm193 = vcmp.lt.u32.totalorder %v190, %v191
        %s194 = sadd.s32 %s183, 1
        %s195 = sld [smem:[#allocation3 + %s194]]
        %s196 = smul.u32 %s195, 16
        %s197 = sld [smem:[#allocation4 + %s194]]
        %s198 = smul.u32 %s197, 16
        %v199 = vstv %s196
        %v200 = vsub.s32 %v181, %v199
        %v201 = vsub.s32 %v182, %v199
        %v202 = vstv %s198
        %vm203 = vcmp.lt.u32.totalorder %v200, %v202
        %vm204 = vcmp.lt.u32.totalorder %v201, %v202
        %vm205 = vmor %vm192, %vm203
        %vm206 = vmor %vm193, %vm204
        %v207 = vld [vmem:[%s155] sm:$0xff]
        %v208 = vsel %vm205, 1, 0
        %v209 = vsel %vm206, 1, 0
        %vm210 = vcmp.eq.s32.totalorder %v208, 1
        %vm211 = vcmp.eq.s32.totalorder %v209, 1
        %v213 = vcombine.high %v207, %v207
        %v215 = vsel %vm210, 0.0, %v207
        %v216 = vsel %vm211, 0.0, %v213
        %v219 = vcombine.low %v215, %v216
        %221 = vst [vmem:[%s173] sm:$0xff] %v219
        %s222 = sand.u32 %s89, 1
        %s223 = scalar_lea.sflag [#allocation7], %s222
        %s224 = sand.u32 %s89, 1
        %s225 = smul.addr %s224, 8
        %s226 = scalar_lea.vmem [#allocation8], %s225
        // Predicated region
        $region29: #{tpu_custom_call.1} parent=23 // pred_check
          %p227 = pneg %p99
        $region30: #{tpu_custom_call.1} parent=23 // pred_check_branch
          %229 = sbr.rel (%p227) target = $region32
        $region31: #{tpu_custom_call.1} parent=23 // pred_region
          %s230 = smul.u32 2, %s35
          %s232 = ssub.s32 128, 128
          %233 = vsyncadd %s223, %s232
          %s234 = smul.addr %s34, 2
          %s235 = sadd.s32 %s230, %s234
          %s236 = smul.addr %s33, 2
          %s237 = sadd.s32 %s235, %s236
          %s238 = smul.addr %s237, 64
          %s239 = scalar_lea.hbm %s3, %s238
          %s241 = sshll.u32 %s226, 4
          %s242 = int_to_ptr.vmem [resolvable:$true] %s241
          %244 = dma.vmem_to_hbm [thread:$0]  %s242, 128, %s239, %s223
        $region32: #{tpu_custom_call.1} parent=23 // pred_fallthru
          _
      $region24: #{tpu_custom_call.1} parent=5 // pred_fallthru
        _
      %p245 = scmp.le.s32.totalorder 2, %s23
      // Predicated region
      $region33: #{tpu_custom_call.1} parent=5 // pred_check
        %p246 = pneg %p245
      $region34: #{tpu_custom_call.1} parent=5 // pred_check_branch
        %248 = sbr.rel (%p246) target = $region36
      $region35: #{tpu_custom_call.1} parent=5 // pred_region
        %s249 = ssub.s32 %s23, 2
        // Predicated region
        $region37: #{tpu_custom_call.1} parent=35 // pred_check
          %p250 = pneg %p105
        $region38: #{tpu_custom_call.1} parent=35 // pred_check_branch
          %252 = sbr.rel (%p250) target = $region40
        $region39: #{tpu_custom_call.1} parent=35 // pred_region
          %s253 = sand.u32 %s90, 1
          %s254 = scalar_lea.sflag [#allocation7], %s253
          %s255 = sand.u32 %s90, 1
          %s256 = smul.addr %s255, 8
          %s257 = scalar_lea.vmem [#allocation8], %s256
          %258 = dma.done %s254, 128
        $region40: #{tpu_custom_call.1} parent=35 // pred_fallthru
          _
      $region36: #{tpu_custom_call.1} parent=5 // pred_fallthru
        _
    $region6: #{tpu_custom_call.1} parent=1 // loop_footer
      %s27 = sadd.s32 1, %s23
    $region7: #{tpu_custom_call.1} parent=1 // loop_footer_branch
      %22 = sbr.rel target = $region3
    $region8: #{tpu_custom_call.1} parent=1 // loop_exit
      _
    %259 = vsyncpa [#allocation6], 1
    %s260 = scalar_lea.sflag [#allocation6], 1
    %261 = vsyncpa %s260, 1
    %262 = vsyncpa [#allocation7], 1
    %s263 = scalar_lea.sflag [#allocation7], 1
    %264 = vsyncpa %s263, 1

</llo_original>
